<compile_context>
chip_gen: v5e
topology: v5e:2x2
jax: 0.10.0
libtpu: 0.0.40
codegen_flags: <defaults>
</compile_context>

<pallas_src>
import functools
import math

import jax
import jax.numpy as jnp
from jax import lax
from jax.experimental import pallas as pl
from jax.experimental.pallas import tpu as pltpu

NEG_BIG = -1e30


# ----------------------------------------------------------------------------
# Generic linear kernels
# ----------------------------------------------------------------------------

def _linear_kernel(x_ref, w_ref, b_ref, o_ref, *, act):
    """y = act(x @ w + b)."""
    y = jnp.dot(x_ref[...], w_ref[...], preferred_element_type=jnp.float32)
    y = y + b_ref[...]
    if act == "relu":
        y = jnp.maximum(y, 0.0)
    elif act == "sigmoid":
        y = jax.nn.sigmoid(y)
    o_ref[...] = y.astype(o_ref.dtype)


def linear(x, w, b, act="none", compute_dtype=None, block_m=256):
    """y = act(x @ w + b).  compute_dtype=bf16 halves weight HBM/VMEM traffic
    and MXU pass count; accumulation stays f32."""
    if compute_dtype is not None:
        x = x.astype(compute_dtype)
        w = w.astype(compute_dtype)
    M, K = x.shape
    N = w.shape[1]
    # TODO(synk): pad M for large row counts that are not multiples of block_m.
    bm = block_m if (M > block_m and M % block_m == 0) else M
    return pl.pallas_call(
        functools.partial(_linear_kernel, act=act),
        grid=(M // bm,),
        in_specs=[
            pl.BlockSpec((bm, K), lambda i: (i, 0)),
            pl.BlockSpec((K, N), lambda i: (0, 0)),
            pl.BlockSpec((1, N), lambda i: (0, 0)),
        ],
        out_specs=pl.BlockSpec((bm, N), lambda i: (i, 0)),
        out_shape=jax.ShapeDtypeStruct((M, N), jnp.float32),
        compiler_params=pltpu.CompilerParams(
            dimension_semantics=("parallel",)),
    )(x, w, b.reshape(1, -1).astype(jnp.float32))


def _linear_bn_relu_kernel(x_ref, w_ref, b_ref, g_ref, be_ref, mu_ref, var_ref,
                           o_ref, *, eps):
    """ReLU(BatchNorm_eval(x @ w + b)) in one kernel."""
    y = jnp.dot(x_ref[...], w_ref[...], preferred_element_type=jnp.float32)
    y = y + b_ref[...]
    inv = lax.rsqrt(var_ref[...] + eps)
    y = (y - mu_ref[...]) * (inv * g_ref[...]) + be_ref[...]
    o_ref[...] = jnp.maximum(y, 0.0)


def linear_bn_relu(x, w, b, gamma, beta, mean, var, eps=1e-5):
    r = lambda a: a.reshape(1, -1)
    return pl.pallas_call(
        functools.partial(_linear_bn_relu_kernel, eps=eps),
        out_shape=jax.ShapeDtypeStruct((x.shape[0], w.shape[1]), jnp.float32),
    )(x, w, r(b), r(gamma), r(beta), r(mean), r(var))


# ----------------------------------------------------------------------------
# Fused multi-head edge attention + residual + BatchNorm + ReLU
# (online softmax over src tiles; MXU only for q@k^T and alpha@v)
# ----------------------------------------------------------------------------

def _attn_tiles(N, S, D, budget_bytes=16 << 20):
    """Pick (dst_tile, src_tile) so the per-step e block (bf16, double
    buffered) plus the f32 [td, ts, D] temporary of the VPU e-contractions
    fits comfortably in scoped VMEM on v5e/v6e/v7x.  Prefers larger dst
    tiles (MXU M-dim utilisation) then larger src tiles."""
    def cost(td, ts):
        return td * ts * D * (2 * 2 + 4)
    tds = [t for t in (128, 64, 32, 16, 8) if N % t == 0] or [N]
    tss = [t for t in (512, 256, 128) if S % t == 0] or [S]
    for td in tds:
        for ts in tss:
            if cost(td, ts) <= budget_bytes:
                return td, ts
    return tds[-1], tss[-1]


def _attn_bn_relu_kernel(q_ref, kT_ref, v_ref, e_ref, mask_ref, skip_ref,
                         g_ref, b_ref, mu_ref, var_ref, o_ref,
                         m_sc, l_sc, acc_sc, *, eps):
    """One (head, dst-tile, src-tile) step of TransformerConv attention over a
    dense (lane-padded) adjacency with online softmax, fused with skip-add +
    eval BatchNorm + ReLU on the last src step.

    score[i, j] = q_i . (k_j + e_ij) * scale   (only where mask[i, j] == 1)
    alpha       = softmax_j(score)
    out[i]      = sum_j alpha[i, j] * (v_j + e_ij)
    then: relu(batchnorm(out + skip)).
    Destination nodes with no incoming edges contribute 0 from attention
    (PyG semantics); padded src columns are masked out.
    """
    s_idx = pl.program_id(2)

    @pl.when(s_idx == 0)
    def _():
        m_sc[...] = jnp.full_like(m_sc, NEG_BIG)
        l_sc[...] = jnp.zeros_like(l_sc)
        acc_sc[...] = jnp.zeros_like(acc_sc)

    q = q_ref[...]               # [td, D]      bf16 (pre-scaled by 1/sqrt(D))
    kT = kT_ref[0]               # [D, ts]      bf16 (pre-transposed)
    v = v_ref[...]               # [ts, D]      bf16
    e = e_ref[0]                 # [td, ts, D]  bf16   e[dst, src, :]
    m = mask_ref[...]            # [td, ts]     f32    mask[dst, src]

    # ---- scores: q@k^T on the MXU; q.e on the VPU/XLU (keeps MXU clean) -----
    s = jnp.dot(q, kT, preferred_element_type=jnp.float32)           # [td, ts]
    e32 = e.astype(jnp.float32)   # f32 elementwise path (safe on v5e: no bf16 VALU)
    qe = jnp.sum(q.astype(jnp.float32)[:, None, :] * e32, axis=-1)   # [td, ts]
    s = jnp.where(m > 0.0, s + qe, NEG_BIG)

    # ---- online softmax over src tiles --------------------------------------
    m_prev = m_sc[...]
    m_new = jnp.maximum(m_prev, jnp.max(s, axis=-1, keepdims=True))
    corr = jnp.exp(m_prev - m_new)
    p = jnp.exp(s - m_new) * m        # `* m` also guards all-masked rows
    l_sc[...] = corr * l_sc[...] + jnp.sum(p, axis=-1, keepdims=True)

    # ---- aggregation: alpha@v on the MXU; alpha.e on the VPU/XLU -------------
    pv = jnp.dot(p.astype(jnp.bfloat16), v,
                 preferred_element_type=jnp.float32)                 # [td, D]
    pe = jnp.sum(p[:, :, None] * e32, axis=1)                        # [td, D]
    acc_sc[...] = corr * acc_sc[...] + pv + pe
    m_sc[...] = m_new

    # ---- fused residual + BatchNorm(eval) + ReLU epilogue --------------------
    @pl.when(s_idx == pl.num_programs(2) - 1)
    def _():
        denom = l_sc[...]
        inv = pl.reciprocal(jnp.where(denom > 0.0, denom, 1.0), approx=True)
        out = acc_sc[...] * inv + skip_ref[...]
        inv_std = lax.rsqrt(var_ref[...] + eps)
        out = (out - mu_ref[...]) * (inv_std * g_ref[...]) + b_ref[...]
        o_ref[...] = jnp.maximum(out, 0.0)


def attention_bn_relu(q, kT, v, e_dense, mask, skip, gamma, beta, mean, var,
                      heads, out_channels, eps=1e-5):
    N, HD = skip.shape
    H, D = heads, out_channels
    S = v.shape[0]
    td, ts = _attn_tiles(N, S, D)
    nt, ns = N // td, S // ts

    r = lambda a: a.reshape(1, -1)

    flops = 8 * H * N * S * D                  # 2 MXU matmuls + 2 VPU contractions
    bytes_accessed = (H * N * S * D * 2        # e (bf16, head-major)
                      + N * S * 4              # mask
                      + H * D * S * 2          # k^T (bf16)
                      + S * HD * 2             # v (bf16)
                      + N * HD * 2             # q (bf16)
                      + 2 * N * HD * 4         # skip + out
                      + 4 * HD * 4)            # bn params

    return pl.pallas_call(
        functools.partial(_attn_bn_relu_kernel, eps=eps),
        grid=(H, nt, ns),
        in_specs=[
            pl.BlockSpec((td, D), lambda h, t, s: (t, h)),               # q
            pl.BlockSpec((1, D, ts), lambda h, t, s: (h, 0, s)),         # k^T
            pl.BlockSpec((ts, D), lambda h, t, s: (s, h)),               # v
            pl.BlockSpec((1, td, ts, D), lambda h, t, s: (h, t, s, 0)),  # e
            pl.BlockSpec((td, ts), lambda h, t, s: (t, s)),              # mask
            pl.BlockSpec((td, D), lambda h, t, s: (t, h)),               # skip
            pl.BlockSpec((1, D), lambda h, t, s: (0, h)),                # gamma
            pl.BlockSpec((1, D), lambda h, t, s: (0, h)),                # beta
            pl.BlockSpec((1, D), lambda h, t, s: (0, h)),                # mean
            pl.BlockSpec((1, D), lambda h, t, s: (0, h)),                # var
        ],
        out_specs=pl.BlockSpec((td, D), lambda h, t, s: (t, h)),
        out_shape=jax.ShapeDtypeStruct((N, HD), jnp.float32),
        scratch_shapes=[pltpu.VMEM((td, 1), jnp.float32),   # running max
                        pltpu.VMEM((td, 1), jnp.float32),   # running denom
                        pltpu.VMEM((td, D), jnp.float32)],  # running acc
        compiler_params=pltpu.CompilerParams(
            dimension_semantics=("parallel", "parallel", "arbitrary"),
            vmem_limit_bytes=64 << 20),
        cost_estimate=pl.CostEstimate(flops=flops,
                                      transcendentals=H * N * S,
                                      bytes_accessed=bytes_accessed),
    )(q, kT, v, e_dense, mask, skip, r(gamma), r(beta), r(mean), r(var))


# ----------------------------------------------------------------------------
# Global mean + max pooling over graphs (tiled over graphs)
# ----------------------------------------------------------------------------

def _pool_kernel(x_ref, mask_ref, mean_ref, max_ref):
    x = x_ref[...]              # [N, F]
    m = mask_ref[0]             # [N, 1]   (0/1 membership of this graph)
    cnt = jnp.sum(m)
    s = jnp.sum(x * m, axis=0, keepdims=True)                    # [1, F]
    mean_ref[0] = s / jnp.maximum(cnt, 1.0)
    xm = jnp.where(m > 0.0, x, NEG_BIG)
    mx = jnp.max(xm, axis=0, keepdims=True)
    max_ref[0] = jnp.where(cnt > 0.0, mx, 0.0)   # empty graph -> 0, stays finite


def global_pool(x, mask):
    """global_mean_pool + global_max_pool given a [B, N] membership mask.
    Grid over graphs; no [B, N, F] broadcast intermediate.
    TODO(synk): add node-axis tiling with running accumulators for very
    large graphs (x is kept VMEM-resident here)."""
    B, N = mask.shape
    F = x.shape[1]
    mask3 = mask.reshape(B, N, 1)
    mean, mx = pl.pallas_call(
        _pool_kernel,
        grid=(B,),
        in_specs=[
            pl.BlockSpec((N, F), lambda b: (0, 0)),
            pl.BlockSpec((1, N, 1), lambda b: (b, 0, 0)),
        ],
        out_specs=(pl.BlockSpec((1, 1, F), lambda b: (b, 0, 0)),
                   pl.BlockSpec((1, 1, F), lambda b: (b, 0, 0))),
        out_shape=(jax.ShapeDtypeStruct((B, 1, F), jnp.float32),
                   jax.ShapeDtypeStruct((B, 1, F), jnp.float32)),
        compiler_params=pltpu.CompilerParams(
            dimension_semantics=("arbitrary",)),
    )(x, mask3)
    return mean.reshape(B, F), mx.reshape(B, F)


# ----------------------------------------------------------------------------
# TransformerConv (PyG semantics: heads, concat=True, root_weight=True)
# fused with the following BatchNorm1d + ReLU.
# ----------------------------------------------------------------------------

def transformer_conv_bn_relu(x, edge_index, edge_attr, p, bn,
                             heads, out_channels, eps=1e-5):
    N = x.shape[0]
    H, D = heads, out_channels
    HD = H * D
    scale = 1.0 / math.sqrt(D)

    # Fused q/k/v/skip projection (bf16 operands, f32 accumulate): one kernel
    # launch, one HBM read of x, half the weight traffic of f32.
    y = linear(x, p["w_qkvs"], p["b_qkvs"], compute_dtype=jnp.bfloat16)  # [N, 4*HD]
    q = y[:, 0 * HD:1 * HD]
    k = y[:, 1 * HD:2 * HD]
    v = y[:, 2 * HD:3 * HD]
    skip = y[:, 3 * HD:4 * HD]

    # Edge-feature projection (lin_edge has no bias).
    e = linear(edge_attr, p["we"], jnp.zeros((HD,), jnp.float32),
               compute_dtype=jnp.bfloat16)                               # [E, HD]

    # Glue: dense, head-major [H, dst, src, D] edge layout (contiguous
    # per-head DMA blocks); src axis padded to a lane-dense multiple of 128.
    # Duplicate (src, dst) pairs would be dropped (last write wins); the
    # synthetic graph below has none.
    # TODO(synk): for production-size graphs switch to an edge-list /
    # scalar-prefetch (PrefetchScalarGridSpec) formulation instead of the
    # dense O(N^2) tensor.
    src, dst = edge_index[0], edge_index[1]
    E = edge_attr.shape[0]
    S = ((N + 127) // 128) * 128
    e_hmd = jnp.transpose(e.reshape(E, H, D), (1, 0, 2)).astype(jnp.bfloat16)
    e_dense = jnp.zeros((H, N, S, D), jnp.bfloat16).at[:, dst, src, :].set(e_hmd)
    mask = jnp.zeros((N, S), jnp.float32).at[dst, src].set(1.0)

    # scale folded into q once; k pre-transposed to [H, D, S] so q@k^T needs
    # no in-kernel transpose; k/v padded along src.
    q_b = (q * scale).astype(jnp.bfloat16)
    kT = jnp.transpose(k.reshape(N, H, D), (1, 2, 0))                    # [H, D, N]
    kT = jnp.pad(kT, ((0, 0), (0, 0), (0, S - N))).astype(jnp.bfloat16)  # [H, D, S]
    v_b = jnp.pad(v, ((0, S - N), (0, 0))).astype(jnp.bfloat16)          # [S, HD]

    gamma, beta, mean, var = bn
    return attention_bn_relu(q_b, kT, v_b, e_dense, mask, skip,
                             gamma, beta, mean, var,
                             heads=H, out_channels=D, eps=eps)


# ----------------------------------------------------------------------------
# Full GNN_QY forward (inference)
# ----------------------------------------------------------------------------

def gnn_qy_forward(params, x, edge_index, edge_attr, batch, solvent_fp,
                   num_graphs, solvent_feature_dim=128):
    h = transformer_conv_bn_relu(x, edge_index, edge_attr,
                                 params["conv1"], params["bn1"],
                                 heads=4, out_channels=128)
    h = transformer_conv_bn_relu(h, edge_index, edge_attr,
                                 params["conv2"], params["bn2"],
                                 heads=4, out_channels=256)

    graph_ids = jnp.arange(num_graphs, dtype=batch.dtype)
    mask = (batch[None, :] == graph_ids[:, None]).astype(jnp.float32)
    x_gap, x_gmp = global_pool(h, mask)
    x_combined = jnp.concatenate([x_gap, x_gmp], axis=1)

    solv = solvent_fp.reshape(-1, solvent_feature_dim)
    solv = linear(solv, *params["fc_solvent"], act="relu")

    z = jnp.concatenate([x_combined, solv], axis=1)
    z = linear_bn_relu(z, *params["fc1"], *params["bn_fc1"])
    # TODO(synk): Dropout is identity at inference; no kernel emitted.
    out = linear(z, *params["fc2"], act="sigmoid")
    return out


# ----------------------------------------------------------------------------
# Deterministic parameter init
# ----------------------------------------------------------------------------

def _init_linear(key, fan_in, fan_out):
    wk, bk = jax.random.split(key)
    s = 1.0 / math.sqrt(fan_in)
    w = jax.random.uniform(wk, (fan_in, fan_out), jnp.float32, -s, s)
    b = jax.random.uniform(bk, (fan_out,), jnp.float32, -s, s)
    return w, b


def _init_conv(key, in_dim, edge_dim, heads, out_channels):
    kq, kk, kv, ke, ks = jax.random.split(key, 5)
    hd = heads * out_channels
    wq, bq = _init_linear(kq, in_dim, hd)
    wk, bk = _init_linear(kk, in_dim, hd)
    wv, bv = _init_linear(kv, in_dim, hd)
    we, _ = _init_linear(ke, edge_dim, hd)          # lin_edge: bias=False
    wskip, bskip = _init_linear(ks, in_dim, hd)
    # Pre-fuse the four x-projections into a single weight/bias.
    return dict(
        w_qkvs=jnp.concatenate([wq, wk, wv, wskip], axis=1),
        b_qkvs=jnp.concatenate([bq, bk, bv, bskip]),
        we=we)


def _init_bn(key, dim):
    k1, k2, k3, k4 = jax.random.split(key, 4)
    gamma = 1.0 + 0.1 * jax.random.normal(k1, (dim,), jnp.float32)
    beta = 0.1 * jax.random.normal(k2, (dim,), jnp.float32)
    mean = 0.1 * jax.random.normal(k3, (dim,), jnp.float32)
    var = 1.0 + 0.1 * jnp.abs(jax.random.normal(k4, (dim,), jnp.float32))
    return (gamma, beta, mean, var)


def init_params(key, node_feature_dim, edge_feature_dim, solvent_feature_dim,
                output_dim):
    keys = jax.random.split(key, 8)
    return dict(
        conv1=_init_conv(keys[0], node_feature_dim, edge_feature_dim, 4, 128),
        bn1=_init_bn(keys[1], 128 * 4),
        conv2=_init_conv(keys[2], 128 * 4, edge_feature_dim, 4, 256),
        bn2=_init_bn(keys[3], 256 * 4),
        fc_solvent=_init_linear(keys[4], solvent_feature_dim, 128),
        fc1=_init_linear(keys[5], 256 * 4 * 2 + 128, 128),
        bn_fc1=_init_bn(keys[6], 128),
        fc2=_init_linear(keys[7], 128, output_dim),
    )


# ----------------------------------------------------------------------------
# Example
# ----------------------------------------------------------------------------

if __name__ == "__main__":
    node_feature_dim = 16
    edge_feature_dim = 8
    solvent_feature_dim = 128
    output_dim = 1

    N = 16            # nodes
    B = 2             # graphs
    nodes_per_graph = N // B

    key = jax.random.PRNGKey(0)
    kp, kx, ke, ks = jax.random.split(key, 4)

    params = init_params(kp, node_feature_dim, edge_feature_dim,
                         solvent_feature_dim, output_dim)

    x = jax.random.normal(kx, (N, node_feature_dim), jnp.float32)

    # Deterministic, duplicate-free edges: within each graph, i -> i+1 and
    # i -> i+2 (mod nodes_per_graph).  edge_index[0]=src, edge_index[1]=dst.
    src_list, dst_list = [], []
    for g in range(B):
        base = g * nodes_per_graph
        for i in range(nodes_per_graph):
            for off in (1, 2):
                src_list.append(base + i)
                dst_list.append(base + (i + off) % nodes_per_graph)
    edge_index = jnp.array([src_list, dst_list], dtype=jnp.int32)   # [2, 32]
    E = edge_index.shape[1]

    edge_attr = jax.random.normal(ke, (E, edge_feature_dim), jnp.float32)
    batch = jnp.repeat(jnp.arange(B, dtype=jnp.int32), nodes_per_graph)
    solvent_fingerprint = jax.random.normal(ks, (B, solvent_feature_dim),
                                            jnp.float32)

    out = gnn_qy_forward(params, x, edge_index, edge_attr, batch,
                         solvent_fingerprint, num_graphs=B,
                         solvent_feature_dim=solvent_feature_dim)
    out = jax.block_until_ready(out)

    assert out.shape == (B, output_dim)
    assert bool(jnp.all(jnp.isfinite(out)))
    assert bool(jnp.all((out >= 0.0) & (out <= 1.0)))
    print("KERNEL_OK")
</pallas_src>

<mosaic_0001>
module attributes {stable_mosaic.version = 11 : i64} {
  func.func @_linear_kernel(%arg0: i32, %arg1: memref<16x16xbf16, #tpu.memory_space<vmem>>, %arg2: memref<16x2048xbf16, #tpu.memory_space<vmem>>, %arg3: memref<1x2048xf32, #tpu.memory_space<vmem>>, %arg4: memref<16x2048xf32, #tpu.memory_space<vmem>>) attributes {dimension_semantics = [#tpu.dimension_semantics<parallel>], iteration_bounds = array<i64: 1>, scalar_prefetch = 0 : i64, scratch_operands = 0 : i64, tpu.core_type = #tpu.core_type<tc>, window_params = [{transform_indices = @transform_0, window_bounds = array<i64: 16, 16>}, {pipeline_mode = #tpu.pipeline_mode<synchronous>, transform_indices = @transform_1, window_bounds = array<i64: 16, 2048>}, {pipeline_mode = #tpu.pipeline_mode<synchronous>, transform_indices = @transform_2, window_bounds = array<i64: 1, 2048>}, {transform_indices = @transform_3, window_bounds = array<i64: 16, 2048>}]} {
    %c0 = arith.constant 0 : index
    %c0_0 = arith.constant 0 : index
    %0 = vector.load %arg1[%c0, %c0_0] : memref<16x16xbf16, #tpu.memory_space<vmem>>, vector<16x16xbf16>
    %c0_1 = arith.constant 0 : index
    %c0_2 = arith.constant 0 : index
    %1 = vector.load %arg2[%c0_1, %c0_2] : memref<16x2048xbf16, #tpu.memory_space<vmem>>, vector<16x2048xbf16>
    %cst = arith.constant dense<0.000000e+00> : vector<16x2048xf32>
    %2 = tpu.matmul %0, %1, %cst {dimension_numbers = #tpu.dot_dimension_numbers<[1], [0], [0], [1], [0, 0, 1, 1], [], []>} : vector<16x16xbf16>, vector<16x2048xbf16>, vector<16x2048xf32> -> vector<16x2048xf32>
    %c0_3 = arith.constant 0 : index
    %c0_4 = arith.constant 0 : index
    %3 = vector.load %arg3[%c0_3, %c0_4] : memref<1x2048xf32, #tpu.memory_space<vmem>>, vector<1x2048xf32>
    %4 = vector.broadcast %3 : vector<1x2048xf32> to vector<16x2048xf32>
    %5 = arith.addf %2, %4 : vector<16x2048xf32>
    %c0_5 = arith.constant 0 : index
    %c0_6 = arith.constant 0 : index
    %6 = vector.load %arg4[%c0_5, %c0_6] : memref<16x2048xf32, #tpu.memory_space<vmem>>, vector<16x2048xf32>
    tpu.vector_store %arg4[%c0_5, %c0_6], %5 {strides = array<i32>} : memref<16x2048xf32, #tpu.memory_space<vmem>>, vector<16x2048xf32>,
    return
  }
  func.func @transform_0(%arg0: i32) -> (i32, i32) {
    %c0_i32 = arith.constant 0 : i32
    %c0_i32_0 = arith.constant 0 : i32
    return %arg0, %c0_i32 : i32, i32
  }
  func.func @transform_1(%arg0: i32) -> (i32, i32) {
    %c0_i32 = arith.constant 0 : i32
    %c0_i32_0 = arith.constant 0 : i32
    %c0_i32_1 = arith.constant 0 : i32
    return %c0_i32, %c0_i32_0 : i32, i32
  }
  func.func @transform_2(%arg0: i32) -> (i32, i32) {
    %c0_i32 = arith.constant 0 : i32
    %c0_i32_0 = arith.constant 0 : i32
    %c0_i32_1 = arith.constant 0 : i32
    return %c0_i32, %c0_i32_0 : i32, i32
  }
  func.func @transform_3(%arg0: i32) -> (i32, i32) {
    %c0_i32 = arith.constant 0 : i32
    %c0_i32_0 = arith.constant 0 : i32
    return %arg0, %c0_i32 : i32, i32
  }
}

</mosaic_0001>

<llo_original>
// kernel: tpu_custom_call.1
$region0: #{tpu_custom_call.1}
  #allocation0 [shape = 'u32[]', space=smem, size = 0x4, offset = 0x4, fixed_abs, tag = 'smem constant byte address 0x4 - core index']
  #allocation1 [shape = 'u32[72,128]{1,0:T(1,128)}', space=vmem, size = 0x9000, scoped, tag = 'internal scratch']
  %s0 = inlined_call_operand.hbm [shape: bf16[16,16], index: 0, kind: input, shape index: {}]
  %s1 = inlined_call_operand.hbm [shape: bf16[16,2048], index: 1, kind: input, shape index: {}]
  %s2 = inlined_call_operand.hbm [shape: f32[1,2048], index: 2, kind: input, shape index: {}]
  %s3 = inlined_call_operand.hbm [shape: f32[16,2048], index: 3, kind: output, shape index: {}]
  %s4 = sld [smem:[#allocation0]]
  $region34: #{tpu_custom_call.1} parent=0
    _
  %s6 = ssub.s32 1, %s4
  %s7 = scalar_select 0, %s6, %s4
  $region1: #{tpu_custom_call.1} parent=0
    #allocation2 [shape = 'u8[4096]{0}', space=vmem, size = 0x1000, scoped, tag = 'input window, operand 0, single buffered']
    #allocation3 [shape = 's32[1]{0}', space=sflag, size = 0x4, scoped, tag = 'scoped memory for tpu_custom_call.1']
    #allocation4 [shape = 's32[1]{0}', space=sflag, size = 0x4, scoped, tag = 'scoped memory for tpu_custom_call.1']
    #allocation5 [shape = 'u8[65536]{0}', space=vmem, size = 0x10000, scoped, tag = 'input window, operand 1, single buffered']
    #allocation6 [shape = 's32[1]{0}', space=sflag, size = 0x4, scoped, tag = 'scoped memory for tpu_custom_call.1']
    #allocation7 [shape = 'u8[8192]{0}', space=vmem, size = 0x2000, scoped, tag = 'input window, operand 2, single buffered']
    #allocation8 [shape = 'u8[131072]{0}', space=vmem, size = 0x20000, scoped, tag = 'output window, operand 0, single buffered']
    %8 = vsyncpa [#allocation3], 0
    %9 = vsyncpa [#allocation6], 0
    %10 = vsyncpa [#allocation4], 0
    // Predicated region
    $region2: #{tpu_custom_call.1} parent=1 // pred_check
      _
    $region3: #{tpu_custom_call.1} parent=1 // pred_check_branch
      %12 = sbr.rel (0) target = $region5
    $region4: #{tpu_custom_call.1} parent=1 // pred_region
      %14 = vsyncadd [#allocation3], 0
      %s15 = sshll.u32 %s0, 4
      %s16 = int_to_ptr.hbm [resolvable:$true] %s15
      %s17 = sshll.u32 [#allocation2], 4
      %s18 = int_to_ptr.vmem [resolvable:$true] %s17
      %23 = dma.hbm_to_vmem [thread:$0]  %s16, 128, %s18, [#allocation3], 64, 64, 4
    $region5: #{tpu_custom_call.1} parent=1 // pred_fallthru
      _
    // Predicated region
    $region6: #{tpu_custom_call.1} parent=1 // pred_check
      _
    $region7: #{tpu_custom_call.1} parent=1 // pred_check_branch
      %25 = sbr.rel (0) target = $region9
    $region8: #{tpu_custom_call.1} parent=1 // pred_region
      %27 = vsyncadd [#allocation6], 0
      %s28 = sshll.u32 %s1, 4
      %s29 = int_to_ptr.hbm [resolvable:$true] %s28
      %s30 = sshll.u32 [#allocation5], 4
      %s31 = int_to_ptr.vmem [resolvable:$true] %s30
      %36 = dma.hbm_to_vmem [thread:$0]  %s29, 2048, %s31, [#allocation6], 1024, 1024, 64
    $region9: #{tpu_custom_call.1} parent=1 // pred_fallthru
      _
    // Predicated region
    $region10: #{tpu_custom_call.1} parent=1 // pred_check
      _
    $region11: #{tpu_custom_call.1} parent=1 // pred_check_branch
      %38 = sbr.rel (0) target = $region13
    $region12: #{tpu_custom_call.1} parent=1 // pred_region
      %40 = vsyncadd [#allocation6], 0
      %s42 = sshll.u32 %s2, 4
      %s43 = int_to_ptr.hbm [resolvable:$true] %s42
      %s44 = sshll.u32 [#allocation7], 4
      %s45 = int_to_ptr.vmem [resolvable:$true] %s44
      %47 = dma.hbm_to_vmem [thread:$0]  %s43, 256, %s45, [#allocation6]
    $region13: #{tpu_custom_call.1} parent=1 // pred_fallthru
      _
    // Predicated region
    $region14: #{tpu_custom_call.1} parent=1 // pred_check
      _
    $region15: #{tpu_custom_call.1} parent=1 // pred_check_branch
      %49 = sbr.rel (0) target = $region17
    $region16: #{tpu_custom_call.1} parent=1 // pred_region
      %51 = dma.done [#allocation3], 128
    $region17: #{tpu_custom_call.1} parent=1 // pred_fallthru
      _
    // Predicated region
    $region18: #{tpu_custom_call.1} parent=1 // pred_check
      _
    $region19: #{tpu_custom_call.1} parent=1 // pred_check_branch
      %53 = sbr.rel (0) target = $region21
    $region20: #{tpu_custom_call.1} parent=1 // pred_region
      %55 = dma.done [#allocation6], 2048
    $region21: #{tpu_custom_call.1} parent=1 // pred_fallthru
      _
    // Predicated region
    $region22: #{tpu_custom_call.1} parent=1 // pred_check
      _
    $region23: #{tpu_custom_call.1} parent=1 // pred_check_branch
      %57 = sbr.rel (0) target = $region25
    $region24: #{tpu_custom_call.1} parent=1 // pred_region
      %59 = dma.done [#allocation6], 256
    $region25: #{tpu_custom_call.1} parent=1 // pred_fallthru
      _
    %v61 = vld [vmem:[#allocation2] sm:$0xf]
    %v62 = vld [vmem:[#allocation2 + $0x4] sm:$0xf]
    %v63 = vld [vmem:[#allocation5] sm:$0xff]
    %v64 = vld [vmem:[#allocation5 + $0x8] sm:$0xff]
    %v65 = vld [vmem:[#allocation5 + $0x10] sm:$0xff]
    %v66 = vld [vmem:[#allocation5 + $0x18] sm:$0xff]
    %v67 = vld [vmem:[#allocation5 + $0x20] sm:$0xff]
    %v68 = vld [vmem:[#allocation5 + $0x28] sm:$0xff]
    %v69 = vld [vmem:[#allocation5 + $0x30] sm:$0xff]
    %v70 = vld [vmem:[#allocation5 + $0x38] sm:$0xff]
    %v71 = vld [vmem:[#allocation5 + $0x40] sm:$0xff]
    %v72 = vld [vmem:[#allocation5 + $0x48] sm:$0xff]
    %v73 = vld [vmem:[#allocation5 + $0x50] sm:$0xff]
    %v74 = vld [vmem:[#allocation5 + $0x58] sm:$0xff]
    %v75 = vld [vmem:[#allocation5 + $0x60] sm:$0xff]
    %v76 = vld [vmem:[#allocation5 + $0x68] sm:$0xff]
    %v77 = vld [vmem:[#allocation5 + $0x70] sm:$0xff]
    %v78 = vld [vmem:[#allocation5 + $0x78] sm:$0xff]
    %v79 = vld [vmem:[#allocation7] sm:$0xff]
    %v80 = vld [vmem:[#allocation7 + $0x8] sm:$0xff]
    %v83 = vperm.slane %v79, 0
    %v84 = vperm.slane %v79, 1
    %v85 = vperm.slane %v79, 2
    %v86 = vperm.slane %v79, 3
    %v87 = vperm.slane %v79, 4
    %v88 = vperm.slane %v79, 5
    %v89 = vperm.slane %v79, 6
    %v90 = vperm.slane %v79, 7
    %v91 = vperm.slane %v80, 0
    %v92 = vperm.slane %v80, 1
    %v93 = vperm.slane %v80, 2
    %v94 = vperm.slane %v80, 3
    %v95 = vperm.slane %v80, 4
    %v96 = vperm.slane %v80, 5
    %v97 = vperm.slane %v80, 6
    %v98 = vperm.slane %v80, 7
    %v117 = vunpack.c.l.b16 %v61
    %v118 = vunpack.c.l.b16 %v62
    %v119 = vpack.c.b16 %v118, %v117
    %v136 = vunpack.c.l.b16 %v63
    %v137 = vunpack.c.h.b16 %v63
    %v138 = vunpack.c.l.b16 %v64
    %v139 = vunpack.c.h.b16 %v64
    %v140 = vunpack.c.l.b16 %v65
    %v141 = vunpack.c.h.b16 %v65
    %v142 = vunpack.c.l.b16 %v66
    %v143 = vunpack.c.h.b16 %v66
    %v144 = vunpack.c.l.b16 %v67
    %v145 = vunpack.c.h.b16 %v67
    %v146 = vunpack.c.l.b16 %v68
    %v147 = vunpack.c.h.b16 %v68
    %v148 = vunpack.c.l.b16 %v69
    %v149 = vunpack.c.h.b16 %v69
    %v150 = vunpack.c.l.b16 %v70
    %v151 = vunpack.c.h.b16 %v70
    %v152 = vunpack.c.l.b16 %v71
    %v153 = vunpack.c.h.b16 %v71
    %v154 = vunpack.c.l.b16 %v72
    %v155 = vunpack.c.h.b16 %v72
    %v156 = vunpack.c.l.b16 %v73
    %v157 = vunpack.c.h.b16 %v73
    %v158 = vunpack.c.l.b16 %v74
    %v159 = vunpack.c.h.b16 %v74
    %v160 = vunpack.c.l.b16 %v75
    %v161 = vunpack.c.h.b16 %v75
    %v162 = vunpack.c.l.b16 %v76
    %v163 = vunpack.c.h.b16 %v76
    %v164 = vunpack.c.l.b16 %v77
    %v165 = vunpack.c.h.b16 %v77
    %v166 = vunpack.c.l.b16 %v78
    %v167 = vunpack.c.h.b16 %v78
    %v168 = vpack.c.b16 %v152, %v136
    %v169 = vpack.c.b16 %v153, %v137
    %v170 = vpack.c.b16 %v154, %v138
    %v171 = vpack.c.b16 %v155, %v139
    %v172 = vpack.c.b16 %v156, %v140
    %v173 = vpack.c.b16 %v157, %v141
    %v174 = vpack.c.b16 %v158, %v142
    %v175 = vpack.c.b16 %v159, %v143
    %v176 = vpack.c.b16 %v160, %v144
    %v177 = vpack.c.b16 %v161, %v145
    %v178 = vpack.c.b16 %v162, %v146
    %v179 = vpack.c.b16 %v163, %v147
    %v180 = vpack.c.b16 %v164, %v148
    %v181 = vpack.c.b16 %v165, %v149
    %v182 = vpack.c.b16 %v166, %v150
    %v183 = vpack.c.b16 %v167, %v151
    %vm200 = vcmask 130048
    %v202 = vsel %vm200, %v119, 0
    %204 = vmatpush.bf16.msra.mxu0 0
    %205 = vmatpush.bf16.msra.mxu0 0
    %206 = vmatpush.bf16.msra.mxu0 0
    %207 = vmatpush.bf16.msra.mxu0 0
    %208 = vmatpush.bf16.msra.mxu0 0
    %209 = vmatpush.bf16.msra.mxu0 0
    %210 = vmatpush.bf16.msra.mxu0 0
    %211 = vmatpush.bf16.msra.mxu0 %v168
    %212 = vmatmul.bf16.gmra.mxu0 %v202
    %v213 = vpop.f32.mrf.mxu0
    %v214 = vadd.f32 %v83, %v213
    %v215 = vpop.f32.mrf.mxu0
    %v216 = vadd.f32 %v83, %v215
    %217 = vdwg.mxu0
    %218 = vmatpush.bf16.msra.mxu0 0
    %219 = vmatpush.bf16.msra.mxu0 0
    %220 = vmatpush.bf16.msra.mxu0 0
    %221 = vmatpush.bf16.msra.mxu0 0
    %222 = vmatpush.bf16.msra.mxu0 0
    %223 = vmatpush.bf16.msra.mxu0 0
    %224 = vmatpush.bf16.msra.mxu0 0
    %225 = vmatpush.bf16.msra.mxu0 %v169
    %226 = vmatmul.bf16.gmra.mxu0 %v202
    %v227 = vpop.f32.mrf.mxu0
    %v228 = vadd.f32 %v84, %v227
    %v229 = vpop.f32.mrf.mxu0
    %v230 = vadd.f32 %v84, %v229
    %231 = vdwg.mxu0
    %232 = vmatpush.bf16.msra.mxu0 0
    %233 = vmatpush.bf16.msra.mxu0 0
    %234 = vmatpush.bf16.msra.mxu0 0
    %235 = vmatpush.bf16.msra.mxu0 0
    %236 = vmatpush.bf16.msra.mxu0 0
    %237 = vmatpush.bf16.msra.mxu0 0
    %238 = vmatpush.bf16.msra.mxu0 0
    %239 = vmatpush.bf16.msra.mxu0 %v170
    %240 = vmatmul.bf16.gmra.mxu0 %v202
    %v241 = vpop.f32.mrf.mxu0
    %v242 = vadd.f32 %v85, %v241
    %v243 = vpop.f32.mrf.mxu0
    %v244 = vadd.f32 %v85, %v243
    %245 = vdwg.mxu0
    %246 = vmatpush.bf16.msra.mxu0 0
    %247 = vmatpush.bf16.msra.mxu0 0
    %248 = vmatpush.bf16.msra.mxu0 0
    %249 = vmatpush.bf16.msra.mxu0 0
    %250 = vmatpush.bf16.msra.mxu0 0
    %251 = vmatpush.bf16.msra.mxu0 0
    %252 = vmatpush.bf16.msra.mxu0 0
    %253 = vmatpush.bf16.msra.mxu0 %v171
    %254 = vmatmul.bf16.gmra.mxu0 %v202
    %v255 = vpop.f32.mrf.mxu0
    %v256 = vadd.f32 %v86, %v255
    %v257 = vpop.f32.mrf.mxu0
    %v258 = vadd.f32 %v86, %v257
    %259 = vdwg.mxu0
    %260 = vmatpush.bf16.msra.mxu0 0
    %261 = vmatpush.bf16.msra.mxu0 0
    %262 = vmatpush.bf16.msra.mxu0 0
    %263 = vmatpush.bf16.msra.mxu0 0
    %264 = vmatpush.bf16.msra.mxu0 0
    %265 = vmatpush.bf16.msra.mxu0 0
    %266 = vmatpush.bf16.msra.mxu0 0
    %267 = vmatpush.bf16.msra.mxu0 %v172
    %268 = vmatmul.bf16.gmra.mxu0 %v202
    %v269 = vpop.f32.mrf.mxu0
    %v270 = vadd.f32 %v87, %v269
    %v271 = vpop.f32.mrf.mxu0
    %v272 = vadd.f32 %v87, %v271
    %273 = vdwg.mxu0
    %274 = vmatpush.bf16.msra.mxu0 0
    %275 = vmatpush.bf16.msra.mxu0 0
    %276 = vmatpush.bf16.msra.mxu0 0
    %277 = vmatpush.bf16.msra.mxu0 0
    %278 = vmatpush.bf16.msra.mxu0 0
    %279 = vmatpush.bf16.msra.mxu0 0
    %280 = vmatpush.bf16.msra.mxu0 0
    %281 = vmatpush.bf16.msra.mxu0 %v173
    %282 = vmatmul.bf16.gmra.mxu0 %v202
    %v283 = vpop.f32.mrf.mxu0
    %v284 = vadd.f32 %v88, %v283
    %v285 = vpop.f32.mrf.mxu0
    %v286 = vadd.f32 %v88, %v285
    %287 = vdwg.mxu0
    %288 = vmatpush.bf16.msra.mxu0 0
    %289 = vmatpush.bf16.msra.mxu0 0
    %290 = vmatpush.bf16.msra.mxu0 0
    %291 = vmatpush.bf16.msra.mxu0 0
    %292 = vmatpush.bf16.msra.mxu0 0
    %293 = vmatpush.bf16.msra.mxu0 0
    %294 = vmatpush.bf16.msra.mxu0 0
    %295 = vmatpush.bf16.msra.mxu0 %v174
    %296 = vmatmul.bf16.gmra.mxu0 %v202
    %v297 = vpop.f32.mrf.mxu0
    %v298 = vadd.f32 %v89, %v297
    %v299 = vpop.f32.mrf.mxu0
    %v300 = vadd.f32 %v89, %v299
    %301 = vdwg.mxu0
    %302 = vmatpush.bf16.msra.mxu0 0
    %303 = vmatpush.bf16.msra.mxu0 0
    %304 = vmatpush.bf16.msra.mxu0 0
    %305 = vmatpush.bf16.msra.mxu0 0
    %306 = vmatpush.bf16.msra.mxu0 0
    %307 = vmatpush.bf16.msra.mxu0 0
    %308 = vmatpush.bf16.msra.mxu0 0
    %309 = vmatpush.bf16.msra.mxu0 %v175
    %310 = vmatmul.bf16.gmra.mxu0 %v202
    %v311 = vpop.f32.mrf.mxu0
    %v312 = vadd.f32 %v90, %v311
    %v313 = vpop.f32.mrf.mxu0
    %v314 = vadd.f32 %v90, %v313
    %315 = vdwg.mxu0
    %316 = vmatpush.bf16.msra.mxu0 0
    %317 = vmatpush.bf16.msra.mxu0 0
    %318 = vmatpush.bf16.msra.mxu0 0
    %319 = vmatpush.bf16.msra.mxu0 0
    %320 = vmatpush.bf16.msra.mxu0 0
    %321 = vmatpush.bf16.msra.mxu0 0
    %322 = vmatpush.bf16.msra.mxu0 0
    %323 = vmatpush.bf16.msra.mxu0 %v176
    %324 = vmatmul.bf16.gmra.mxu0 %v202
    %v325 = vpop.f32.mrf.mxu0
    %v326 = vadd.f32 %v91, %v325
    %v327 = vpop.f32.mrf.mxu0
    %v328 = vadd.f32 %v91, %v327
    %329 = vdwg.mxu0
    %330 = vmatpush.bf16.msra.mxu0 0
    %331 = vmatpush.bf16.msra.mxu0 0
    %332 = vmatpush.bf16.msra.mxu0 0
    %333 = vmatpush.bf16.msra.mxu0 0
    %334 = vmatpush.bf16.msra.mxu0 0
    %335 = vmatpush.bf16.msra.mxu0 0
    %336 = vmatpush.bf16.msra.mxu0 0
    %337 = vmatpush.bf16.msra.mxu0 %v177
    %338 = vmatmul.bf16.gmra.mxu0 %v202
    %v339 = vpop.f32.mrf.mxu0
    %v340 = vadd.f32 %v92, %v339
    %v341 = vpop.f32.mrf.mxu0
    %v342 = vadd.f32 %v92, %v341
    %343 = vdwg.mxu0
    %344 = vmatpush.bf16.msra.mxu0 0
    %345 = vmatpush.bf16.msra.mxu0 0
    %346 = vmatpush.bf16.msra.mxu0 0
    %347 = vmatpush.bf16.msra.mxu0 0
    %348 = vmatpush.bf16.msra.mxu0 0
    %349 = vmatpush.bf16.msra.mxu0 0
    %350 = vmatpush.bf16.msra.mxu0 0
    %351 = vmatpush.bf16.msra.mxu0 %v178
    %352 = vmatmul.bf16.gmra.mxu0 %v202
    %v353 = vpop.f32.mrf.mxu0
    %v354 = vadd.f32 %v93, %v353
    %v355 = vpop.f32.mrf.mxu0
    %v356 = vadd.f32 %v93, %v355
    %357 = vdwg.mxu0
    %358 = vmatpush.bf16.msra.mxu0 0
    %359 = vmatpush.bf16.msra.mxu0 0
    %360 = vmatpush.bf16.msra.mxu0 0
    %361 = vmatpush.bf16.msra.mxu0 0
    %362 = vmatpush.bf16.msra.mxu0 0
    %363 = vmatpush.bf16.msra.mxu0 0
    %364 = vmatpush.bf16.msra.mxu0 0
    %365 = vmatpush.bf16.msra.mxu0 %v179
    %366 = vmatmul.bf16.gmra.mxu0 %v202
    %v367 = vpop.f32.mrf.mxu0
    %v368 = vadd.f32 %v94, %v367
    %v369 = vpop.f32.mrf.mxu0
    %v370 = vadd.f32 %v94, %v369
    %371 = vdwg.mxu0
    %372 = vmatpush.bf16.msra.mxu0 0
    %373 = vmatpush.bf16.msra.mxu0 0
    %374 = vmatpush.bf16.msra.mxu0 0
    %375 = vmatpush.bf16.msra.mxu0 0
    %376 = vmatpush.bf16.msra.mxu0 0
    %377 = vmatpush.bf16.msra.mxu0 0
    %378 = vmatpush.bf16.msra.mxu0 0
    %379 = vmatpush.bf16.msra.mxu0 %v180
    %380 = vmatmul.bf16.gmra.mxu0 %v202
    %v381 = vpop.f32.mrf.mxu0
    %v382 = vadd.f32 %v95, %v381
    %v383 = vpop.f32.mrf.mxu0
    %v384 = vadd.f32 %v95, %v383
    %385 = vdwg.mxu0
    %386 = vmatpush.bf16.msra.mxu0 0
    %387 = vmatpush.bf16.msra.mxu0 0
    %388 = vmatpush.bf16.msra.mxu0 0
    %389 = vmatpush.bf16.msra.mxu0 0
    %390 = vmatpush.bf16.msra.mxu0 0
    %391 = vmatpush.bf16.msra.mxu0 0
    %392 = vmatpush.bf16.msra.mxu0 0
    %393 = vmatpush.bf16.msra.mxu0 %v181
    %394 = vmatmul.bf16.gmra.mxu0 %v202
    %v395 = vpop.f32.mrf.mxu0
    %v396 = vadd.f32 %v96, %v395
    %v397 = vpop.f32.mrf.mxu0
    %v398 = vadd.f32 %v96, %v397
    %399 = vdwg.mxu0
    %400 = vmatpush.bf16.msra.mxu0 0
    %401 = vmatpush.bf16.msra.mxu0 0
    %402 = vmatpush.bf16.msra.mxu0 0
    %403 = vmatpush.bf16.msra.mxu0 0
    %404 = vmatpush.bf16.msra.mxu0 0
    %405 = vmatpush.bf16.msra.mxu0 0
    %406 = vmatpush.bf16.msra.mxu0 0
    %407 = vmatpush.bf16.msra.mxu0 %v182
    %408 = vmatmul.bf16.gmra.mxu0 %v202
    %v409 = vpop.f32.mrf.mxu0
    %v410 = vadd.f32 %v97, %v409
    %v411 = vpop.f32.mrf.mxu0
    %v412 = vadd.f32 %v97, %v411
    %413 = vdwg.mxu0
    %414 = vmatpush.bf16.msra.mxu0 0
    %415 = vmatpush.bf16.msra.mxu0 0
    %416 = vmatpush.bf16.msra.mxu0 0
    %417 = vmatpush.bf16.msra.mxu0 0
    %418 = vmatpush.bf16.msra.mxu0 0
    %419 = vmatpush.bf16.msra.mxu0 0
    %420 = vmatpush.bf16.msra.mxu0 0
    %421 = vmatpush.bf16.msra.mxu0 %v183
    %422 = vmatmul.bf16.gmra.mxu0 %v202
    %v423 = vpop.f32.mrf.mxu0
    %v424 = vadd.f32 %v98, %v423
    %v425 = vpop.f32.mrf.mxu0
    %v426 = vadd.f32 %v98, %v425
    %427 = vdwg.mxu0
    %428 = vst [vmem:[#allocation8] sm:$0xff] %v214
    %429 = vst [vmem:[#allocation8 + $0x8] sm:$0xff] %v228
    %430 = vst [vmem:[#allocation8 + $0x10] sm:$0xff] %v242
    %431 = vst [vmem:[#allocation8 + $0x18] sm:$0xff] %v256
    %432 = vst [vmem:[#allocation8 + $0x20] sm:$0xff] %v270
    %433 = vst [vmem:[#allocation8 + $0x28] sm:$0xff] %v284
    %434 = vst [vmem:[#allocation8 + $0x30] sm:$0xff] %v298
    %435 = vst [vmem:[#allocation8 + $0x38] sm:$0xff] %v312
    %436 = vst [vmem:[#allocation8 + $0x40] sm:$0xff] %v326
    %437 = vst [vmem:[#allocation8 + $0x48] sm:$0xff] %v340
    %438 = vst [vmem:[#allocation8 + $0x50] sm:$0xff] %v354
    %439 = vst [vmem:[#allocation8 + $0x58] sm:$0xff] %v368
    %440 = vst [vmem:[#allocation8 + $0x60] sm:$0xff] %v382
    %441 = vst [vmem:[#allocation8 + $0x68] sm:$0xff] %v396
    %442 = vst [vmem:[#allocation8 + $0x70] sm:$0xff] %v410
    %443 = vst [vmem:[#allocation8 + $0x78] sm:$0xff] %v424
    %444 = vst [vmem:[#allocation8 + $0x80] sm:$0xff] %v216
    %445 = vst [vmem:[#allocation8 + $0x88] sm:$0xff] %v230
    %446 = vst [vmem:[#allocation8 + $0x90] sm:$0xff] %v244
    %447 = vst [vmem:[#allocation8 + $0x98] sm:$0xff] %v258
    %448 = vst [vmem:[#allocation8 + $0xa0] sm:$0xff] %v272
    %449 = vst [vmem:[#allocation8 + $0xa8] sm:$0xff] %v286
    %450 = vst [vmem:[#allocation8 + $0xb0] sm:$0xff] %v300
    %451 = vst [vmem:[#allocation8 + $0xb8] sm:$0xff] %v314
    %452 = vst [vmem:[#allocation8 + $0xc0] sm:$0xff] %v328
    %453 = vst [vmem:[#allocation8 + $0xc8] sm:$0xff] %v342
    %454 = vst [vmem:[#allocation8 + $0xd0] sm:$0xff] %v356
    %455 = vst [vmem:[#allocation8 + $0xd8] sm:$0xff] %v370
    %456 = vst [vmem:[#allocation8 + $0xe0] sm:$0xff] %v384
    %457 = vst [vmem:[#allocation8 + $0xe8] sm:$0xff] %v398
    %458 = vst [vmem:[#allocation8 + $0xf0] sm:$0xff] %v412
    %459 = vst [vmem:[#allocation8 + $0xf8] sm:$0xff] %v426
    // Predicated region
    $region26: #{tpu_custom_call.1} parent=1 // pred_check
      _
    $region27: #{tpu_custom_call.1} parent=1 // pred_check_branch
      %461 = sbr.rel (0) target = $region29
    $region28: #{tpu_custom_call.1} parent=1 // pred_region
      %463 = vsyncadd [#allocation4], 0
      %s464 = sshll.u32 [#allocation8], 4
      %s465 = int_to_ptr.vmem [resolvable:$true] %s464
      %s466 = sshll.u32 %s3, 4
      %s467 = int_to_ptr.hbm [resolvable:$true] %s466
      %472 = dma.vmem_to_hbm [thread:$0]  %s465, 4096, %s467, [#allocation4], 2048, 2048, 128
    $region29: #{tpu_custom_call.1} parent=1 // pred_fallthru
      _
    // Predicated region
    $region30: #{tpu_custom_call.1} parent=1 // pred_check
      _
    $region31: #{tpu_custom_call.1} parent=1 // pred_check_branch
      %474 = sbr.rel (0) target = $region33
    $region32: #{tpu_custom_call.1} parent=1 // pred_region
      %476 = dma.done [#allocation4], 4096
    $region33: #{tpu_custom_call.1} parent=1 // pred_fallthru
      _
    %477 = vsyncpa [#allocation3], 1
    %478 = vsyncpa [#allocation6], 1
    %479 = vsyncpa [#allocation4], 1

</llo_original>
